<compile_context>
chip_gen: v7x
topology: tpu7x:2x2x1
jax: 0.10.0
libtpu: 0.0.40
codegen_flags: <defaults>
</compile_context>

<pallas_src>
import functools

import jax
import jax.numpy as jnp
from jax.experimental import pallas as pl
from jax.experimental.pallas import tpu as pltpu


# ------------------------------- parameter slab --------------------------------

def _round8(n):
    return ((n + 7) // 8) * 8


def _slab_offsets(input_size, hidden_size):
    """8-row-aligned offsets inside the packed parameter slab."""
    off_wih = 0
    off_bias = _round8(input_size)
    off_wfc = off_bias + 8
    off_bfc = off_wfc + _round8(hidden_size)
    rows = off_bfc + 8
    return off_wih, off_bias, off_wfc, off_bfc, rows


# ----------------------------------- kernel ------------------------------------

def _lstm_fc_kernel(x_ref, whh_ref, slab_ref, out_ref, gx_ref, *,
                    batch, seq_len, input_size, hidden_size,
                    off_bias, off_wfc, off_bfc):
    """Fused LSTM recurrence + ReLU + Linear.

    x_ref    : (T*B, I)   seq-major input rows (row t*B + b = x[b, t, :])
    whh_ref  : (H, 4H)    hidden->gate weights, gate columns in (i, f, o, g) order
    slab_ref : (rows, 4H) packed params: W_ih^T | combined bias | W_fc^T (C padded
                          to 4H cols with zeros) | b_fc (padded), 8-row aligned
    out_ref  : (B, 4H)    lane-dense logits; real logits live in columns [0:C)
    gx_ref   : (T*B, 4H)  VMEM scratch for the hoisted input projection
    """
    B, T, I, H = batch, seq_len, input_size, hidden_size

    whh = whh_ref[...]                          # (H, 4H), loaded once, loop-invariant
    wih = slab_ref[pl.ds(0, I), :]              # (I, 4H)
    bias = slab_ref[pl.ds(off_bias, 1), :]      # (1, 4H)

    # Hoisted input projection for the whole sequence; bias folded in once.
    gx_ref[...] = (jnp.dot(x_ref[...], wih, preferred_element_type=jnp.float32)
                   + bias)                      # (T*B, 4H), t-major rows

    h = jnp.zeros((B, H), dtype=jnp.float32)
    c = jnp.zeros((B, H), dtype=jnp.float32)

    # Fully-unrolled recurrence: only h @ W_hh sits on the serial dependency chain.
    for t in range(T):
        gates = (gx_ref[pl.ds(t * B, B), :]
                 + jnp.dot(h, whh, preferred_element_type=jnp.float32))   # (B, 4H)
        # Full-128-lane EUP passes; per-gate values are plain lane subranges of these.
        sig = jax.nn.sigmoid(gates)
        tnh = jnp.tanh(gates)
        i_g = sig[:, 0:H]
        f_g = sig[:, H:2 * H]
        o_g = sig[:, 2 * H:3 * H]
        g_g = tnh[:, 3 * H:4 * H]
        c = f_g * c + i_g * g_g
        h = o_g * jnp.tanh(c)

    # lstm_hn.view(-1, H) with num_layers=1 -> (B, H); ReLU; Dropout(p=0.2) identity.
    relu_h = jnp.maximum(h, 0.0)
    wfc = slab_ref[pl.ds(off_wfc, H), :]        # (H, 4H), cols >= C are zero
    bfc = slab_ref[pl.ds(off_bfc, 1), :]        # (1, 4H)
    out_ref[...] = (jnp.dot(relu_h, wfc, preferred_element_type=jnp.float32)
                    + bfc)                      # lane-dense (B, 4H) store


def network_forward(x_bsi, kernel_params, num_classes):
    """x_bsi: (batch, seq_len, input_size) float32, batch_first like PyTorch."""
    whh_k, slab = kernel_params
    B, T, I = x_bsi.shape
    H = whh_k.shape[0]
    H4 = whh_k.shape[1]
    _, off_bias, off_wfc, off_bfc, _ = _slab_offsets(I, H)

    # Seq-major layout so per-step gate rows are contiguous (tiny XLA transpose).
    x_sm = jnp.transpose(x_bsi, (1, 0, 2)).reshape(T * B, I).astype(jnp.float32)

    kernel = functools.partial(
        _lstm_fc_kernel, batch=B, seq_len=T, input_size=I, hidden_size=H,
        off_bias=off_bias, off_wfc=off_wfc, off_bfc=off_bfc)
    vmem = pl.BlockSpec(memory_space=pltpu.MemorySpace.VMEM)

    out_pad = pl.pallas_call(
        kernel,
        out_shape=jax.ShapeDtypeStruct((B, H4), jnp.float32),
        in_specs=[vmem, vmem, vmem],
        out_specs=vmem,
        scratch_shapes=[pltpu.VMEM((T * B, H4), jnp.float32)],
    )(x_sm, whh_k, slab)
    return out_pad[:, :num_classes]


# ----------------------------- parameter handling -------------------------------

def init_torch_params(key, input_size, hidden_size, num_classes):
    """PyTorch-layout parameters, uniform(-1/sqrt(H), 1/sqrt(H)) init."""
    ks = jax.random.split(key, 6)
    lim = 1.0 / jnp.sqrt(jnp.float32(hidden_size))
    w_ih = jax.random.uniform(ks[0], (4 * hidden_size, input_size), jnp.float32, -lim, lim)
    w_hh = jax.random.uniform(ks[1], (4 * hidden_size, hidden_size), jnp.float32, -lim, lim)
    b_ih = jax.random.uniform(ks[2], (4 * hidden_size,), jnp.float32, -lim, lim)
    b_hh = jax.random.uniform(ks[3], (4 * hidden_size,), jnp.float32, -lim, lim)
    w_fc = jax.random.uniform(ks[4], (num_classes, hidden_size), jnp.float32, -lim, lim)
    b_fc = jax.random.uniform(ks[5], (num_classes,), jnp.float32, -lim, lim)
    return w_ih, w_hh, b_ih, b_hh, w_fc, b_fc


def _reorder_ifgo_to_ifog(w, H):
    """Permute gate blocks stacked along axis 0: (i, f, g, o) -> (i, f, o, g)."""
    return jnp.concatenate([w[0:H], w[H:2 * H], w[3 * H:4 * H], w[2 * H:3 * H]], axis=0)


def prepare_kernel_params(torch_params, hidden_size):
    """Permute gates (i,f,g,o)->(i,f,o,g), pre-transpose, fold biases, pack the slab."""
    w_ih, w_hh, b_ih, b_hh, w_fc, b_fc = torch_params
    H = hidden_size
    I = w_ih.shape[1]
    C = w_fc.shape[0]
    H4 = 4 * H
    assert C <= H4, "num_classes must fit in the 4H-wide lane-dense FC pad"

    w_ih_k = _reorder_ifgo_to_ifog(w_ih, H).T.astype(jnp.float32)        # (I, 4H)
    w_hh_k = _reorder_ifgo_to_ifog(w_hh, H).T.astype(jnp.float32)        # (H, 4H)
    bias_k = _reorder_ifgo_to_ifog(b_ih + b_hh, H).astype(jnp.float32)   # (4H,)

    wfc_pad = jnp.zeros((H, H4), jnp.float32).at[:, :C].set(w_fc.T)      # (H, 4H)
    bfc_pad = jnp.zeros((H4,), jnp.float32).at[:C].set(b_fc)             # (4H,)

    _, off_bias, off_wfc, off_bfc, rows = _slab_offsets(I, H)
    slab = jnp.zeros((rows, H4), jnp.float32)
    slab = slab.at[0:I, :].set(w_ih_k)
    slab = slab.at[off_bias, :].set(bias_k)
    slab = slab.at[off_wfc:off_wfc + H, :].set(wfc_pad)
    slab = slab.at[off_bfc, :].set(bfc_pad)
    return w_hh_k, slab


# ------------------------------- pure-JAX reference -----------------------------

def reference_forward(x_bsi, torch_params, hidden_size):
    """PyTorch-semantics reference (original i,f,g,o gate order)."""
    w_ih, w_hh, b_ih, b_hh, w_fc, b_fc = torch_params
    H = hidden_size
    B, T, _ = x_bsi.shape
    h = jnp.zeros((B, H), jnp.float32)
    c = jnp.zeros((B, H), jnp.float32)
    for t in range(T):
        g = x_bsi[:, t, :] @ w_ih.T + h @ w_hh.T + b_ih + b_hh
        i_g = jax.nn.sigmoid(g[:, 0:H])
        f_g = jax.nn.sigmoid(g[:, H:2 * H])
        g_g = jnp.tanh(g[:, 2 * H:3 * H])
        o_g = jax.nn.sigmoid(g[:, 3 * H:4 * H])
        c = f_g * c + i_g * g_g
        h = o_g * jnp.tanh(c)
    return jnp.maximum(h, 0.0) @ w_fc.T + b_fc


if __name__ == "__main__":
    batch = 2
    seq_len = 8
    input_size = 16
    hidden_layer_size = 32
    num_classes = 4

    key = jax.random.PRNGKey(0)
    k_x, k_p = jax.random.split(key)

    x = jax.random.normal(k_x, (batch, seq_len, input_size), dtype=jnp.float32)
    torch_params = init_torch_params(k_p, input_size, hidden_layer_size, num_classes)
    kernel_params = prepare_kernel_params(torch_params, hidden_layer_size)

    out = network_forward(x, kernel_params, num_classes)
    out = jax.block_until_ready(out)

    ref = reference_forward(x, torch_params, hidden_layer_size)
    assert out.shape == (batch, num_classes)
    assert jnp.allclose(out, ref, atol=1e-4, rtol=1e-4), "kernel mismatch vs reference"

    print("KERNEL_OK")
</pallas_src>

<mosaic_0001>
module attributes {stable_mosaic.version = 11 : i64} {
  func.func @_lstm_fc_kernel(%arg0: memref<16x16xf32, #tpu.memory_space<vmem>>, %arg1: memref<32x128xf32, #tpu.memory_space<vmem>>, %arg2: memref<64x128xf32, #tpu.memory_space<vmem>>, %arg3: memref<2x128xf32, #tpu.memory_space<vmem>>, %arg4: memref<16x128xf32, #tpu.memory_space<vmem>>) attributes {dimension_semantics = [], scalar_prefetch = 0 : i64, scratch_operands = 1 : i64, tpu.core_type = #tpu.core_type<tc>} {
    %c0 = arith.constant 0 : index
    %c0_0 = arith.constant 0 : index
    %0 = vector.load %arg1[%c0, %c0_0] : memref<32x128xf32, #tpu.memory_space<vmem>>, vector<32x128xf32>
    %c0_1 = arith.constant 0 : index
    %c0_2 = arith.constant 0 : index
    %1 = vector.load %arg2[%c0_1, %c0_2] : memref<64x128xf32, #tpu.memory_space<vmem>>, vector<16x128xf32>
    %c16 = arith.constant 16 : index
    %c0_3 = arith.constant 0 : index
    %2 = vector.load %arg2[%c16, %c0_3] : memref<64x128xf32, #tpu.memory_space<vmem>>, vector<1x128xf32>
    %c0_4 = arith.constant 0 : index
    %c0_5 = arith.constant 0 : index
    %3 = vector.load %arg0[%c0_4, %c0_5] : memref<16x16xf32, #tpu.memory_space<vmem>>, vector<16x16xf32>
    %cst = arith.constant dense<0.000000e+00> : vector<16x128xf32>
    %4 = tpu.matmul %3, %1, %cst {dimension_numbers = #tpu.dot_dimension_numbers<[1], [0], [0], [1], [0, 0, 1, 1], [], []>} : vector<16x16xf32>, vector<16x128xf32>, vector<16x128xf32> -> vector<16x128xf32>
    %5 = vector.broadcast %2 : vector<1x128xf32> to vector<16x128xf32>
    %6 = arith.addf %4, %5 : vector<16x128xf32>
    %c0_6 = arith.constant 0 : index
    %c0_7 = arith.constant 0 : index
    %7 = vector.load %arg4[%c0_6, %c0_7] : memref<16x128xf32, #tpu.memory_space<vmem>>, vector<16x128xf32>
    tpu.vector_store %arg4[%c0_6, %c0_7], %6 {strides = array<i32>} : memref<16x128xf32, #tpu.memory_space<vmem>>, vector<16x128xf32>,
    %cst_8 = arith.constant 0.000000e+00 : f32
    %8 = vector.broadcast %cst_8 : f32 to vector<2x32xf32>
    %cst_9 = arith.constant 0.000000e+00 : f32
    %9 = vector.broadcast %cst_9 : f32 to vector<2x32xf32>
    %c0_10 = arith.constant 0 : index
    %c0_11 = arith.constant 0 : index
    %10 = vector.load %arg4[%c0_10, %c0_11] : memref<16x128xf32, #tpu.memory_space<vmem>>, vector<2x128xf32>
    %cst_12 = arith.constant dense<0.000000e+00> : vector<2x128xf32>
    %11 = tpu.matmul %8, %0, %cst_12 {dimension_numbers = #tpu.dot_dimension_numbers<[1], [0], [0], [1], [0, 0, 1, 1], [], []>} : vector<2x32xf32>, vector<32x128xf32>, vector<2x128xf32> -> vector<2x128xf32>
    %12 = arith.addf %10, %11 : vector<2x128xf32>
    %13 = arith.negf %12 : vector<2x128xf32>
    %14 = math.exp %13 : vector<2x128xf32>
    %cst_13 = arith.constant 1.000000e+00 : f32
    %15 = vector.broadcast %cst_13 : f32 to vector<2x128xf32>
    %16 = arith.addf %15, %14 : vector<2x128xf32>
    %17 = arith.divf %15, %16 : vector<2x128xf32>
    %18 = math.tanh %12 : vector<2x128xf32>
    %19 = vector.extract_strided_slice %17 {offsets = [0, 0], sizes = [2, 32], strides = [1, 1]} : vector<2x128xf32> to vector<2x32xf32>
    %20 = vector.extract_strided_slice %17 {offsets = [0, 32], sizes = [2, 32], strides = [1, 1]} : vector<2x128xf32> to vector<2x32xf32>
    %21 = vector.extract_strided_slice %17 {offsets = [0, 64], sizes = [2, 32], strides = [1, 1]} : vector<2x128xf32> to vector<2x32xf32>
    %22 = vector.extract_strided_slice %18 {offsets = [0, 96], sizes = [2, 32], strides = [1, 1]} : vector<2x128xf32> to vector<2x32xf32>
    %23 = arith.mulf %20, %9 : vector<2x32xf32>
    %24 = arith.mulf %19, %22 : vector<2x32xf32>
    %25 = arith.addf %23, %24 : vector<2x32xf32>
    %26 = math.tanh %25 : vector<2x32xf32>
    %27 = arith.mulf %21, %26 : vector<2x32xf32>
    %c2 = arith.constant 2 : index
    %c0_14 = arith.constant 0 : index
    %28 = vector.load %arg4[%c2, %c0_14] : memref<16x128xf32, #tpu.memory_space<vmem>>, vector<2x128xf32>
    %cst_15 = arith.constant dense<0.000000e+00> : vector<2x128xf32>
    %29 = tpu.matmul %27, %0, %cst_15 {dimension_numbers = #tpu.dot_dimension_numbers<[1], [0], [0], [1], [0, 0, 1, 1], [], []>} : vector<2x32xf32>, vector<32x128xf32>, vector<2x128xf32> -> vector<2x128xf32>
    %30 = arith.addf %28, %29 : vector<2x128xf32>
    %31 = arith.negf %30 : vector<2x128xf32>
    %32 = math.exp %31 : vector<2x128xf32>
    %cst_16 = arith.constant 1.000000e+00 : f32
    %33 = vector.broadcast %cst_16 : f32 to vector<2x128xf32>
    %34 = arith.addf %33, %32 : vector<2x128xf32>
    %35 = arith.divf %33, %34 : vector<2x128xf32>
    %36 = math.tanh %30 : vector<2x128xf32>
    %37 = vector.extract_strided_slice %35 {offsets = [0, 0], sizes = [2, 32], strides = [1, 1]} : vector<2x128xf32> to vector<2x32xf32>
    %38 = vector.extract_strided_slice %35 {offsets = [0, 32], sizes = [2, 32], strides = [1, 1]} : vector<2x128xf32> to vector<2x32xf32>
    %39 = vector.extract_strided_slice %35 {offsets = [0, 64], sizes = [2, 32], strides = [1, 1]} : vector<2x128xf32> to vector<2x32xf32>
    %40 = vector.extract_strided_slice %36 {offsets = [0, 96], sizes = [2, 32], strides = [1, 1]} : vector<2x128xf32> to vector<2x32xf32>
    %41 = arith.mulf %38, %25 : vector<2x32xf32>
    %42 = arith.mulf %37, %40 : vector<2x32xf32>
    %43 = arith.addf %41, %42 : vector<2x32xf32>
    %44 = math.tanh %43 : vector<2x32xf32>
    %45 = arith.mulf %39, %44 : vector<2x32xf32>
    %c4 = arith.constant 4 : index
    %c0_17 = arith.constant 0 : index
    %46 = vector.load %arg4[%c4, %c0_17] : memref<16x128xf32, #tpu.memory_space<vmem>>, vector<2x128xf32>
    %cst_18 = arith.constant dense<0.000000e+00> : vector<2x128xf32>
    %47 = tpu.matmul %45, %0, %cst_18 {dimension_numbers = #tpu.dot_dimension_numbers<[1], [0], [0], [1], [0, 0, 1, 1], [], []>} : vector<2x32xf32>, vector<32x128xf32>, vector<2x128xf32> -> vector<2x128xf32>
    %48 = arith.addf %46, %47 : vector<2x128xf32>
    %49 = arith.negf %48 : vector<2x128xf32>
    %50 = math.exp %49 : vector<2x128xf32>
    %cst_19 = arith.constant 1.000000e+00 : f32
    %51 = vector.broadcast %cst_19 : f32 to vector<2x128xf32>
    %52 = arith.addf %51, %50 : vector<2x128xf32>
    %53 = arith.divf %51, %52 : vector<2x128xf32>
    %54 = math.tanh %48 : vector<2x128xf32>
    %55 = vector.extract_strided_slice %53 {offsets = [0, 0], sizes = [2, 32], strides = [1, 1]} : vector<2x128xf32> to vector<2x32xf32>
    %56 = vector.extract_strided_slice %53 {offsets = [0, 32], sizes = [2, 32], strides = [1, 1]} : vector<2x128xf32> to vector<2x32xf32>
    %57 = vector.extract_strided_slice %53 {offsets = [0, 64], sizes = [2, 32], strides = [1, 1]} : vector<2x128xf32> to vector<2x32xf32>
    %58 = vector.extract_strided_slice %54 {offsets = [0, 96], sizes = [2, 32], strides = [1, 1]} : vector<2x128xf32> to vector<2x32xf32>
    %59 = arith.mulf %56, %43 : vector<2x32xf32>
    %60 = arith.mulf %55, %58 : vector<2x32xf32>
    %61 = arith.addf %59, %60 : vector<2x32xf32>
    %62 = math.tanh %61 : vector<2x32xf32>
    %63 = arith.mulf %57, %62 : vector<2x32xf32>
    %c6 = arith.constant 6 : index
    %c0_20 = arith.constant 0 : index
    %64 = vector.load %arg4[%c6, %c0_20] : memref<16x128xf32, #tpu.memory_space<vmem>>, vector<2x128xf32>
    %cst_21 = arith.constant dense<0.000000e+00> : vector<2x128xf32>
    %65 = tpu.matmul %63, %0, %cst_21 {dimension_numbers = #tpu.dot_dimension_numbers<[1], [0], [0], [1], [0, 0, 1, 1], [], []>} : vector<2x32xf32>, vector<32x128xf32>, vector<2x128xf32> -> vector<2x128xf32>
    %66 = arith.addf %64, %65 : vector<2x128xf32>
    %67 = arith.negf %66 : vector<2x128xf32>
    %68 = math.exp %67 : vector<2x128xf32>
    %cst_22 = arith.constant 1.000000e+00 : f32
    %69 = vector.broadcast %cst_22 : f32 to vector<2x128xf32>
    %70 = arith.addf %69, %68 : vector<2x128xf32>
    %71 = arith.divf %69, %70 : vector<2x128xf32>
    %72 = math.tanh %66 : vector<2x128xf32>
    %73 = vector.extract_strided_slice %71 {offsets = [0, 0], sizes = [2, 32], strides = [1, 1]} : vector<2x128xf32> to vector<2x32xf32>
    %74 = vector.extract_strided_slice %71 {offsets = [0, 32], sizes = [2, 32], strides = [1, 1]} : vector<2x128xf32> to vector<2x32xf32>
    %75 = vector.extract_strided_slice %71 {offsets = [0, 64], sizes = [2, 32], strides = [1, 1]} : vector<2x128xf32> to vector<2x32xf32>
    %76 = vector.extract_strided_slice %72 {offsets = [0, 96], sizes = [2, 32], strides = [1, 1]} : vector<2x128xf32> to vector<2x32xf32>
    %77 = arith.mulf %74, %61 : vector<2x32xf32>
    %78 = arith.mulf %73, %76 : vector<2x32xf32>
    %79 = arith.addf %77, %78 : vector<2x32xf32>
    %80 = math.tanh %79 : vector<2x32xf32>
    %81 = arith.mulf %75, %80 : vector<2x32xf32>
    %c8 = arith.constant 8 : index
    %c0_23 = arith.constant 0 : index
    %82 = vector.load %arg4[%c8, %c0_23] : memref<16x128xf32, #tpu.memory_space<vmem>>, vector<2x128xf32>
    %cst_24 = arith.constant dense<0.000000e+00> : vector<2x128xf32>
    %83 = tpu.matmul %81, %0, %cst_24 {dimension_numbers = #tpu.dot_dimension_numbers<[1], [0], [0], [1], [0, 0, 1, 1], [], []>} : vector<2x32xf32>, vector<32x128xf32>, vector<2x128xf32> -> vector<2x128xf32>
    %84 = arith.addf %82, %83 : vector<2x128xf32>
    %85 = arith.negf %84 : vector<2x128xf32>
    %86 = math.exp %85 : vector<2x128xf32>
    %cst_25 = arith.constant 1.000000e+00 : f32
    %87 = vector.broadcast %cst_25 : f32 to vector<2x128xf32>
    %88 = arith.addf %87, %86 : vector<2x128xf32>
    %89 = arith.divf %87, %88 : vector<2x128xf32>
    %90 = math.tanh %84 : vector<2x128xf32>
    %91 = vector.extract_strided_slice %89 {offsets = [0, 0], sizes = [2, 32], strides = [1, 1]} : vector<2x128xf32> to vector<2x32xf32>
    %92 = vector.extract_strided_slice %89 {offsets = [0, 32], sizes = [2, 32], strides = [1, 1]} : vector<2x128xf32> to vector<2x32xf32>
    %93 = vector.extract_strided_slice %89 {offsets = [0, 64], sizes = [2, 32], strides = [1, 1]} : vector<2x128xf32> to vector<2x32xf32>
    %94 = vector.extract_strided_slice %90 {offsets = [0, 96], sizes = [2, 32], strides = [1, 1]} : vector<2x128xf32> to vector<2x32xf32>
    %95 = arith.mulf %92, %79 : vector<2x32xf32>
    %96 = arith.mulf %91, %94 : vector<2x32xf32>
    %97 = arith.addf %95, %96 : vector<2x32xf32>
    %98 = math.tanh %97 : vector<2x32xf32>
    %99 = arith.mulf %93, %98 : vector<2x32xf32>
    %c10 = arith.constant 10 : index
    %c0_26 = arith.constant 0 : index
    %100 = vector.load %arg4[%c10, %c0_26] : memref<16x128xf32, #tpu.memory_space<vmem>>, vector<2x128xf32>
    %cst_27 = arith.constant dense<0.000000e+00> : vector<2x128xf32>
    %101 = tpu.matmul %99, %0, %cst_27 {dimension_numbers = #tpu.dot_dimension_numbers<[1], [0], [0], [1], [0, 0, 1, 1], [], []>} : vector<2x32xf32>, vector<32x128xf32>, vector<2x128xf32> -> vector<2x128xf32>
    %102 = arith.addf %100, %101 : vector<2x128xf32>
    %103 = arith.negf %102 : vector<2x128xf32>
    %104 = math.exp %103 : vector<2x128xf32>
    %cst_28 = arith.constant 1.000000e+00 : f32
    %105 = vector.broadcast %cst_28 : f32 to vector<2x128xf32>
    %106 = arith.addf %105, %104 : vector<2x128xf32>
    %107 = arith.divf %105, %106 : vector<2x128xf32>
    %108 = math.tanh %102 : vector<2x128xf32>
    %109 = vector.extract_strided_slice %107 {offsets = [0, 0], sizes = [2, 32], strides = [1, 1]} : vector<2x128xf32> to vector<2x32xf32>
    %110 = vector.extract_strided_slice %107 {offsets = [0, 32], sizes = [2, 32], strides = [1, 1]} : vector<2x128xf32> to vector<2x32xf32>
    %111 = vector.extract_strided_slice %107 {offsets = [0, 64], sizes = [2, 32], strides = [1, 1]} : vector<2x128xf32> to vector<2x32xf32>
    %112 = vector.extract_strided_slice %108 {offsets = [0, 96], sizes = [2, 32], strides = [1, 1]} : vector<2x128xf32> to vector<2x32xf32>
    %113 = arith.mulf %110, %97 : vector<2x32xf32>
    %114 = arith.mulf %109, %112 : vector<2x32xf32>
    %115 = arith.addf %113, %114 : vector<2x32xf32>
    %116 = math.tanh %115 : vector<2x32xf32>
    %117 = arith.mulf %111, %116 : vector<2x32xf32>
    %c12 = arith.constant 12 : index
    %c0_29 = arith.constant 0 : index
    %118 = vector.load %arg4[%c12, %c0_29] : memref<16x128xf32, #tpu.memory_space<vmem>>, vector<2x128xf32>
    %cst_30 = arith.constant dense<0.000000e+00> : vector<2x128xf32>
    %119 = tpu.matmul %117, %0, %cst_30 {dimension_numbers = #tpu.dot_dimension_numbers<[1], [0], [0], [1], [0, 0, 1, 1], [], []>} : vector<2x32xf32>, vector<32x128xf32>, vector<2x128xf32> -> vector<2x128xf32>
    %120 = arith.addf %118, %119 : vector<2x128xf32>
    %121 = arith.negf %120 : vector<2x128xf32>
    %122 = math.exp %121 : vector<2x128xf32>
    %cst_31 = arith.constant 1.000000e+00 : f32
    %123 = vector.broadcast %cst_31 : f32 to vector<2x128xf32>
    %124 = arith.addf %123, %122 : vector<2x128xf32>
    %125 = arith.divf %123, %124 : vector<2x128xf32>
    %126 = math.tanh %120 : vector<2x128xf32>
    %127 = vector.extract_strided_slice %125 {offsets = [0, 0], sizes = [2, 32], strides = [1, 1]} : vector<2x128xf32> to vector<2x32xf32>
    %128 = vector.extract_strided_slice %125 {offsets = [0, 32], sizes = [2, 32], strides = [1, 1]} : vector<2x128xf32> to vector<2x32xf32>
    %129 = vector.extract_strided_slice %125 {offsets = [0, 64], sizes = [2, 32], strides = [1, 1]} : vector<2x128xf32> to vector<2x32xf32>
    %130 = vector.extract_strided_slice %126 {offsets = [0, 96], sizes = [2, 32], strides = [1, 1]} : vector<2x128xf32> to vector<2x32xf32>
    %131 = arith.mulf %128, %115 : vector<2x32xf32>
    %132 = arith.mulf %127, %130 : vector<2x32xf32>
    %133 = arith.addf %131, %132 : vector<2x32xf32>
    %134 = math.tanh %133 : vector<2x32xf32>
    %135 = arith.mulf %129, %134 : vector<2x32xf32>
    %c14 = arith.constant 14 : index
    %c0_32 = arith.constant 0 : index
    %136 = vector.load %arg4[%c14, %c0_32] : memref<16x128xf32, #tpu.memory_space<vmem>>, vector<2x128xf32>
    %cst_33 = arith.constant dense<0.000000e+00> : vector<2x128xf32>
    %137 = tpu.matmul %135, %0, %cst_33 {dimension_numbers = #tpu.dot_dimension_numbers<[1], [0], [0], [1], [0, 0, 1, 1], [], []>} : vector<2x32xf32>, vector<32x128xf32>, vector<2x128xf32> -> vector<2x128xf32>
    %138 = arith.addf %136, %137 : vector<2x128xf32>
    %139 = arith.negf %138 : vector<2x128xf32>
    %140 = math.exp %139 : vector<2x128xf32>
    %cst_34 = arith.constant 1.000000e+00 : f32
    %141 = vector.broadcast %cst_34 : f32 to vector<2x128xf32>
    %142 = arith.addf %141, %140 : vector<2x128xf32>
    %143 = arith.divf %141, %142 : vector<2x128xf32>
    %144 = math.tanh %138 : vector<2x128xf32>
    %145 = vector.extract_strided_slice %143 {offsets = [0, 0], sizes = [2, 32], strides = [1, 1]} : vector<2x128xf32> to vector<2x32xf32>
    %146 = vector.extract_strided_slice %143 {offsets = [0, 32], sizes = [2, 32], strides = [1, 1]} : vector<2x128xf32> to vector<2x32xf32>
    %147 = vector.extract_strided_slice %143 {offsets = [0, 64], sizes = [2, 32], strides = [1, 1]} : vector<2x128xf32> to vector<2x32xf32>
    %148 = vector.extract_strided_slice %144 {offsets = [0, 96], sizes = [2, 32], strides = [1, 1]} : vector<2x128xf32> to vector<2x32xf32>
    %149 = arith.mulf %146, %133 : vector<2x32xf32>
    %150 = arith.mulf %145, %148 : vector<2x32xf32>
    %151 = arith.addf %149, %150 : vector<2x32xf32>
    %152 = math.tanh %151 : vector<2x32xf32>
    %153 = arith.mulf %147, %152 : vector<2x32xf32>
    %cst_35 = arith.constant 0.000000e+00 : f32
    %154 = vector.broadcast %cst_35 : f32 to vector<2x32xf32>
    %155 = arith.maximumf %153, %154 : vector<2x32xf32>
    %c24 = arith.constant 24 : index
    %c0_36 = arith.constant 0 : index
    %156 = vector.load %arg2[%c24, %c0_36] : memref<64x128xf32, #tpu.memory_space<vmem>>, vector<32x128xf32>
    %c56 = arith.constant 56 : index
    %c0_37 = arith.constant 0 : index
    %157 = vector.load %arg2[%c56, %c0_37] : memref<64x128xf32, #tpu.memory_space<vmem>>, vector<1x128xf32>
    %cst_38 = arith.constant dense<0.000000e+00> : vector<2x128xf32>
    %158 = tpu.matmul %155, %156, %cst_38 {dimension_numbers = #tpu.dot_dimension_numbers<[1], [0], [0], [1], [0, 0, 1, 1], [], []>} : vector<2x32xf32>, vector<32x128xf32>, vector<2x128xf32> -> vector<2x128xf32>
    %159 = vector.broadcast %157 : vector<1x128xf32> to vector<2x128xf32>
    %160 = arith.addf %158, %159 : vector<2x128xf32>
    %c0_39 = arith.constant 0 : index
    %c0_40 = arith.constant 0 : index
    %161 = vector.load %arg3[%c0_39, %c0_40] : memref<2x128xf32, #tpu.memory_space<vmem>>, vector<2x128xf32>
    tpu.vector_store %arg3[%c0_39, %c0_40], %160 {strides = array<i32>} : memref<2x128xf32, #tpu.memory_space<vmem>>, vector<2x128xf32>,
    return
  }
}

</mosaic_0001>

<llo_original>
// kernel: tpu_custom_call.1
$region0: #{tpu_custom_call.1}
  #allocation0 [shape = 'u32[]', space=smem, size = 0x4, offset = 0x4, fixed_abs, tag = 'smem constant byte address 0x4 - core index']
  #allocation1 [shape = 'u32[144,128]{1,0:T(1,128)}', space=vmem, size = 0x12000, scoped, tag = 'internal scratch']
  #allocation2 [shape = 'f32[16,128]{1,0:T(8,128)}', space=vmem, size = 0x2000, scoped, tag = 'scratch operand']
  %s0 = inlined_call_operand.hbm [shape: f32[16,16], index: 0, kind: input, shape index: {}]
  %s1 = inlined_call_operand.hbm [shape: f32[32,128], index: 1, kind: input, shape index: {}]
  %s2 = inlined_call_operand.hbm [shape: f32[64,128], index: 2, kind: input, shape index: {}]
  %s3 = inlined_call_operand.hbm [shape: f32[2,128], index: 3, kind: output, shape index: {}]
  %s4 = sld [smem:[#allocation0]]
  $region34: #{tpu_custom_call.1} parent=0
    _
  %s6 = ssub.s32 1, %s4
  %s7 = scalar_select 0, %s6, %s4
  $region1: #{tpu_custom_call.1} parent=0
    #allocation3 [shape = 'u8[8192]{0}', space=vmem, size = 0x2000, scoped, tag = 'input window, operand 0, single buffered']
    #allocation4 [shape = 's32[1]{0}', space=sflag, size = 0x4, scoped, tag = 'scoped memory for tpu_custom_call.1']
    #allocation5 [shape = 's32[1]{0}', space=sflag, size = 0x4, scoped, tag = 'scoped memory for tpu_custom_call.1']
    #allocation6 [shape = 'u8[16384]{0}', space=vmem, size = 0x4000, scoped, tag = 'input window, operand 1, single buffered']
    #allocation7 [shape = 's32[1]{0}', space=sflag, size = 0x4, scoped, tag = 'scoped memory for tpu_custom_call.1']
    #allocation8 [shape = 'u8[32768]{0}', space=vmem, size = 0x8000, scoped, tag = 'input window, operand 2, single buffered']
    #allocation9 [shape = 'u8[1024]{0}', space=vmem, size = 0x400, scoped, tag = 'output window, operand 0, single buffered']
    %8 = vsyncpa [#allocation4], 0
    %9 = vsyncpa [#allocation7], 0
    %10 = vsyncpa [#allocation5], 0
    // Predicated region
    $region2: #{tpu_custom_call.1} parent=1 // pred_check
      _
    $region3: #{tpu_custom_call.1} parent=1 // pred_check_branch
      %12 = sbr.rel (0) target = $region5
    $region4: #{tpu_custom_call.1} parent=1 // pred_region
      %s14 = ssub.s32 256, 256
      %15 = vsyncadd [#allocation4], %s14
      %s16 = sshll.u32 [#allocation3], 4
      %s17 = int_to_ptr.vmem [resolvable:$true] %s16
      %22 = dma.hbm_to_vmem [thread:$0]  %s0, 256, %s17, [#allocation4], 128, 128, 8
    $region5: #{tpu_custom_call.1} parent=1 // pred_fallthru
      _
    // Predicated region
    $region6: #{tpu_custom_call.1} parent=1 // pred_check
      _
    $region7: #{tpu_custom_call.1} parent=1 // pred_check_branch
      %24 = sbr.rel (0) target = $region9
    $region8: #{tpu_custom_call.1} parent=1 // pred_region
      %s26 = ssub.s32 512, 512
      %27 = vsyncadd [#allocation7], %s26
      %s28 = sshll.u32 [#allocation6], 4
      %s29 = int_to_ptr.vmem [resolvable:$true] %s28
      %34 = dma.hbm_to_vmem [thread:$0]  %s1, 512, %s29, [#allocation7], 128, 128, 8
    $region9: #{tpu_custom_call.1} parent=1 // pred_fallthru
      _
    // Predicated region
    $region10: #{tpu_custom_call.1} parent=1 // pred_check
      _
    $region11: #{tpu_custom_call.1} parent=1 // pred_check_branch
      %36 = sbr.rel (0) target = $region13
    $region12: #{tpu_custom_call.1} parent=1 // pred_region
      %s38 = ssub.s32 1024, 1024
      %39 = vsyncadd [#allocation7], %s38
      %s40 = sshll.u32 [#allocation8], 4
      %s41 = int_to_ptr.vmem [resolvable:$true] %s40
      %46 = dma.hbm_to_vmem [thread:$0]  %s2, 1024, %s41, [#allocation7], 128, 128, 8
    $region13: #{tpu_custom_call.1} parent=1 // pred_fallthru
      _
    // Predicated region
    $region14: #{tpu_custom_call.1} parent=1 // pred_check
      _
    $region15: #{tpu_custom_call.1} parent=1 // pred_check_branch
      %48 = sbr.rel (0) target = $region17
    $region16: #{tpu_custom_call.1} parent=1 // pred_region
      %49 = dma.done [#allocation4], 256
    $region17: #{tpu_custom_call.1} parent=1 // pred_fallthru
      _
    // Predicated region
    $region18: #{tpu_custom_call.1} parent=1 // pred_check
      _
    $region19: #{tpu_custom_call.1} parent=1 // pred_check_branch
      %51 = sbr.rel (0) target = $region21
    $region20: #{tpu_custom_call.1} parent=1 // pred_region
      %52 = dma.done [#allocation7], 512
    $region21: #{tpu_custom_call.1} parent=1 // pred_fallthru
      _
    // Predicated region
    $region22: #{tpu_custom_call.1} parent=1 // pred_check
      _
    $region23: #{tpu_custom_call.1} parent=1 // pred_check_branch
      %54 = sbr.rel (0) target = $region25
    $region24: #{tpu_custom_call.1} parent=1 // pred_region
      %55 = dma.done [#allocation7], 1024
    $region25: #{tpu_custom_call.1} parent=1 // pred_fallthru
      _
    %v56 = vld [vmem:[#allocation6] sm:$0xff]
    %v57 = vld [vmem:[#allocation6 + $0x8] sm:$0xff]
    %v58 = vld [vmem:[#allocation6 + $0x10] sm:$0xff]
    %v59 = vld [vmem:[#allocation6 + $0x18] sm:$0xff]
    %v60 = vld [vmem:[#allocation8] sm:$0xff]
    %v61 = vld [vmem:[#allocation8 + $0x8] sm:$0xff]
    %v62 = vld [vmem:[#allocation8 + $0x10] sm:$0x1]
    %v63 = vld [vmem:[#allocation3] sm:$0xff]
    %v64 = vld [vmem:[#allocation3 + $0x8] sm:$0xff]
    %v65 = vlaneseq
    %v66 = vshrl.u32 %v65, 7
    %v67 = vsub.s32 0, %v66
    %v68 = vrot.slane %v62, %v67
    %vm69 = vcmask 130048
    %v71 = vsel %vm69, %v63, 0
    %v74 = vsel %vm69, %v64, 0
    %76 = vmatprep.subr.mxu0 0.0
    %77 = vmatpush1.msra.mxu0 %v60
    %78 = vmatprep.subr.mxu0 0.0
    %79 = vmatpush1.msra.mxu0 %v61
    %80 = vmatprep.subr.mxu0 0.0
    %81 = vmatpush1.msra.mxu0 0.0
    %82 = vmatprep.subr.mxu0 0.0
    %83 = vmatpush1.msra.mxu0 0.0
    %84 = vmatprep.subr.mxu0 0.0
    %85 = vmatpush1.msra.mxu0 0.0
    %86 = vmatprep.subr.mxu0 0.0
    %87 = vmatpush1.msra.mxu0 0.0
    %88 = vmatprep.subr.mxu0 0.0
    %89 = vmatpush1.msra.mxu0 0.0
    %90 = vmatprep.subr.mxu0 0.0
    %91 = vmatpush1.msra.mxu0 0.0
    %92 = vmatprep.subr.mxu0 0.0
    %93 = vmatpush1.msra.mxu0 0.0
    %94 = vmatprep.subr.mxu0 0.0
    %95 = vmatpush1.msra.mxu0 0.0
    %96 = vmatprep.subr.mxu0 0.0
    %97 = vmatpush1.msra.mxu0 0.0
    %98 = vmatprep.subr.mxu0 0.0
    %99 = vmatpush1.msra.mxu0 0.0
    %100 = vmatprep.subr.mxu0 0.0
    %101 = vmatpush1.msra.mxu0 0.0
    %102 = vmatprep.subr.mxu0 0.0
    %103 = vmatpush1.msra.mxu0 0.0
    %104 = vmatprep.subr.mxu0 0.0
    %105 = vmatpush1.msra.mxu0 0.0
    %106 = vmatprep.subr.mxu0 0.0
    %107 = vmatpush1.msra.mxu0 0.0
    %108 = vmatprep.subr.mxu0 0.0
    %109 = vmatpush1.msra.mxu0 0.0
    %110 = vmatprep.subr.mxu0 0.0
    %111 = vmatpush1.msra.mxu0 0.0
    %112 = vmatprep.subr.mxu0 0.0
    %113 = vmatpush1.msra.mxu0 0.0
    %114 = vmatprep.subr.mxu0 0.0
    %115 = vmatpush1.msra.mxu0 0.0
    %116 = vmatprep.subr.mxu0 0.0
    %117 = vmatpush1.msra.mxu0 0.0
    %118 = vmatprep.subr.mxu0 0.0
    %119 = vmatpush1.msra.mxu0 0.0
    %120 = vmatprep.subr.mxu0 0.0
    %121 = vmatpush1.msra.mxu0 0.0
    %122 = vmatprep.subr.mxu0 0.0
    %123 = vmatpush1.msra.mxu0 0.0
    %124 = vmatprep.subr.mxu0 0.0
    %125 = vmatpush1.msra.mxu0 0.0
    %126 = vmatprep.subr.mxu0 0.0
    %127 = vmatpush1.msra.mxu0 0.0
    %128 = vmatprep.subr.mxu0 0.0
    %129 = vmatpush1.msra.mxu0 0.0
    %130 = vmatprep.subr.mxu0 0.0
    %131 = vmatpush1.msra.mxu0 0.0
    %132 = vmatprep.subr.mxu0 0.0
    %133 = vmatpush1.msra.mxu0 0.0
    %134 = vmatprep.subr.mxu0 0.0
    %135 = vmatpush1.msra.mxu0 0.0
    %136 = vmatprep.subr.mxu0 0.0
    %137 = vmatpush1.msra.mxu0 0.0
    %138 = vmatprep.subr.mxu0 0.0
    %139 = vmatpush1.msra.mxu0 0.0
    %140 = vmatprep.mubr.f32.mxu0 0.0
    %141 = vmatmul.mubr.f32.gmra.mrb[0].mxu0 %v71
    %v142 = vpop.f32.mrb[0].mxu0
    %v143 = vadd.f32 %v68, %v142
    %v144 = vpop.f32.mrb[0].mxu0
    %145 = vmatprep.mubr.f32.mxu0 0.0
    %146 = vmatmul.mubr.f32.gmra.mrb[0].mxu0 %v74
    %v147 = vpop.f32.mrb[0].mxu0
    %v148 = vadd.f32 %v68, %v147
    %v149 = vpop.f32.mrb[0].mxu0
    %150 = vdwg.mxu0
    %151 = vst [vmem:[#allocation2] sm:$0xff] %v143
    %152 = vst [vmem:[#allocation2 + $0x8] sm:$0xff] %v148
    %v153 = vld [vmem:[#allocation2] sm:$0x3]
    %vm154 = vcmask 261120
    %v156 = vsel %vm154, 0.0, 0
    %158 = vmatprep.subr.mxu0 0.0
    %159 = vmatpush1.msra.mxu0 %v56
    %160 = vmatprep.subr.mxu0 0.0
    %161 = vmatpush1.msra.mxu0 %v57
    %162 = vmatprep.subr.mxu0 0.0
    %163 = vmatpush1.msra.mxu0 %v58
    %164 = vmatprep.subr.mxu0 0.0
    %165 = vmatpush1.msra.mxu0 %v59
    %166 = vmatprep.subr.mxu0 0.0
    %167 = vmatpush1.msra.mxu0 0.0
    %168 = vmatprep.subr.mxu0 0.0
    %169 = vmatpush1.msra.mxu0 0.0
    %170 = vmatprep.subr.mxu0 0.0
    %171 = vmatpush1.msra.mxu0 0.0
    %172 = vmatprep.subr.mxu0 0.0
    %173 = vmatpush1.msra.mxu0 0.0
    %174 = vmatprep.subr.mxu0 0.0
    %175 = vmatpush1.msra.mxu0 0.0
    %176 = vmatprep.subr.mxu0 0.0
    %177 = vmatpush1.msra.mxu0 0.0
    %178 = vmatprep.subr.mxu0 0.0
    %179 = vmatpush1.msra.mxu0 0.0
    %180 = vmatprep.subr.mxu0 0.0
    %181 = vmatpush1.msra.mxu0 0.0
    %182 = vmatprep.subr.mxu0 0.0
    %183 = vmatpush1.msra.mxu0 0.0
    %184 = vmatprep.subr.mxu0 0.0
    %185 = vmatpush1.msra.mxu0 0.0
    %186 = vmatprep.subr.mxu0 0.0
    %187 = vmatpush1.msra.mxu0 0.0
    %188 = vmatprep.subr.mxu0 0.0
    %189 = vmatpush1.msra.mxu0 0.0
    %190 = vmatprep.subr.mxu0 0.0
    %191 = vmatpush1.msra.mxu0 0.0
    %192 = vmatprep.subr.mxu0 0.0
    %193 = vmatpush1.msra.mxu0 0.0
    %194 = vmatprep.subr.mxu0 0.0
    %195 = vmatpush1.msra.mxu0 0.0
    %196 = vmatprep.subr.mxu0 0.0
    %197 = vmatpush1.msra.mxu0 0.0
    %198 = vmatprep.subr.mxu0 0.0
    %199 = vmatpush1.msra.mxu0 0.0
    %200 = vmatprep.subr.mxu0 0.0
    %201 = vmatpush1.msra.mxu0 0.0
    %202 = vmatprep.subr.mxu0 0.0
    %203 = vmatpush1.msra.mxu0 0.0
    %204 = vmatprep.subr.mxu0 0.0
    %205 = vmatpush1.msra.mxu0 0.0
    %206 = vmatprep.subr.mxu0 0.0
    %207 = vmatpush1.msra.mxu0 0.0
    %208 = vmatprep.subr.mxu0 0.0
    %209 = vmatpush1.msra.mxu0 0.0
    %210 = vmatprep.subr.mxu0 0.0
    %211 = vmatpush1.msra.mxu0 0.0
    %212 = vmatprep.subr.mxu0 0.0
    %213 = vmatpush1.msra.mxu0 0.0
    %214 = vmatprep.subr.mxu0 0.0
    %215 = vmatpush1.msra.mxu0 0.0
    %216 = vmatprep.subr.mxu0 0.0
    %217 = vmatpush1.msra.mxu0 0.0
    %218 = vmatprep.subr.mxu0 0.0
    %219 = vmatpush1.msra.mxu0 0.0
    %220 = vmatprep.subr.mxu0 0.0
    %221 = vmatpush1.msra.mxu0 0.0
    %222 = vmatprep.mubr.f32.mxu0 0.0
    %223 = vmatmul.mubr.f32.gmra.mrb[0].mxu0 %v156
    %v224 = vpop.f32.mrb[0].mxu0
    %v225 = vadd.f32 0.0, %v224
    %v226 = vpop.f32.mrb[0].mxu0
    %227 = vdwg.mxu0
    %v228 = vadd.f32 %v153, %v225
    %v229 = vxor.u32 %v228, 2147483648
    %v230 = vmul.f32 %v229, 1.442695
    %v231 = vpow.pop %v230
    %v232 = vadd.f32 %v231, 1.0
    %v233 = vrcp.pop %v232
    %v234 = vmul.f32 1.0, %v233
    %v235 = vtanh.pop %v228
    %v236 = vmul.f32 %v234, 0.0
    %238 = vrot.lane.b32.xlu0 %v235, 32
    %v239 = vpop.permute.xlu0 %238
    %v241 = vmul.f32 %v234, %v239
    %243 = vrot.lane.b32.xlu0 %v241, 32
    %v244 = vpop.permute.xlu0 %243
    %v246 = vadd.f32 %v236, %v244
    %v247 = vtanh.pop %v246
    %249 = vrot.lane.b32.xlu0 %v247, 32
    %v250 = vpop.permute.xlu0 %249
    %v252 = vmul.f32 %v234, %v250
    %v253 = vld [vmem:[#allocation2 + $0x2] sm:$0x3]
    %255 = vrot.lane.b32.xlu0 %v252, 64
    %v256 = vpop.permute.xlu0 %255
    %v257 = vsel %vm154, %v256, 0
    %259 = vmatprep.subr.mxu0 0.0
    %260 = vmatpush1.msra.mxu0 %v56
    %261 = vmatprep.subr.mxu0 0.0
    %262 = vmatpush1.msra.mxu0 %v57
    %263 = vmatprep.subr.mxu0 0.0
    %264 = vmatpush1.msra.mxu0 %v58
    %265 = vmatprep.subr.mxu0 0.0
    %266 = vmatpush1.msra.mxu0 %v59
    %267 = vmatprep.subr.mxu0 0.0
    %268 = vmatpush1.msra.mxu0 0.0
    %269 = vmatprep.subr.mxu0 0.0
    %270 = vmatpush1.msra.mxu0 0.0
    %271 = vmatprep.subr.mxu0 0.0
    %272 = vmatpush1.msra.mxu0 0.0
    %273 = vmatprep.subr.mxu0 0.0
    %274 = vmatpush1.msra.mxu0 0.0
    %275 = vmatprep.subr.mxu0 0.0
    %276 = vmatpush1.msra.mxu0 0.0
    %277 = vmatprep.subr.mxu0 0.0
    %278 = vmatpush1.msra.mxu0 0.0
    %279 = vmatprep.subr.mxu0 0.0
    %280 = vmatpush1.msra.mxu0 0.0
    %281 = vmatprep.subr.mxu0 0.0
    %282 = vmatpush1.msra.mxu0 0.0
    %283 = vmatprep.subr.mxu0 0.0
    %284 = vmatpush1.msra.mxu0 0.0
    %285 = vmatprep.subr.mxu0 0.0
    %286 = vmatpush1.msra.mxu0 0.0
    %287 = vmatprep.subr.mxu0 0.0
    %288 = vmatpush1.msra.mxu0 0.0
    %289 = vmatprep.subr.mxu0 0.0
    %290 = vmatpush1.msra.mxu0 0.0
    %291 = vmatprep.subr.mxu0 0.0
    %292 = vmatpush1.msra.mxu0 0.0
    %293 = vmatprep.subr.mxu0 0.0
    %294 = vmatpush1.msra.mxu0 0.0
    %295 = vmatprep.subr.mxu0 0.0
    %296 = vmatpush1.msra.mxu0 0.0
    %297 = vmatprep.subr.mxu0 0.0
    %298 = vmatpush1.msra.mxu0 0.0
    %299 = vmatprep.subr.mxu0 0.0
    %300 = vmatpush1.msra.mxu0 0.0
    %301 = vmatprep.subr.mxu0 0.0
    %302 = vmatpush1.msra.mxu0 0.0
    %303 = vmatprep.subr.mxu0 0.0
    %304 = vmatpush1.msra.mxu0 0.0
    %305 = vmatprep.subr.mxu0 0.0
    %306 = vmatpush1.msra.mxu0 0.0
    %307 = vmatprep.subr.mxu0 0.0
    %308 = vmatpush1.msra.mxu0 0.0
    %309 = vmatprep.subr.mxu0 0.0
    %310 = vmatpush1.msra.mxu0 0.0
    %311 = vmatprep.subr.mxu0 0.0
    %312 = vmatpush1.msra.mxu0 0.0
    %313 = vmatprep.subr.mxu0 0.0
    %314 = vmatpush1.msra.mxu0 0.0
    %315 = vmatprep.subr.mxu0 0.0
    %316 = vmatpush1.msra.mxu0 0.0
    %317 = vmatprep.subr.mxu0 0.0
    %318 = vmatpush1.msra.mxu0 0.0
    %319 = vmatprep.subr.mxu0 0.0
    %320 = vmatpush1.msra.mxu0 0.0
    %321 = vmatprep.subr.mxu0 0.0
    %322 = vmatpush1.msra.mxu0 0.0
    %323 = vmatprep.mubr.f32.mxu0 0.0
    %324 = vmatmul.mubr.f32.gmra.mrb[0].mxu0 %v257
    %v325 = vpop.f32.mrb[0].mxu0
    %v326 = vadd.f32 0.0, %v325
    %v327 = vpop.f32.mrb[0].mxu0
    %328 = vdwg.mxu0
    %v329 = vadd.f32 %v253, %v326
    %v330 = vxor.u32 %v329, 2147483648
    %v331 = vmul.f32 %v330, 1.442695
    %v332 = vpow.pop %v331
    %v333 = vadd.f32 %v332, 1.0
    %v334 = vrcp.pop %v333
    %v335 = vmul.f32 1.0, %v334
    %v336 = vtanh.pop %v329
    %v337 = vmul.f32 %v335, %v246
    %339 = vrot.lane.b32.xlu0 %v336, 32
    %v340 = vpop.permute.xlu0 %339
    %v342 = vmul.f32 %v335, %v340
    %344 = vrot.lane.b32.xlu0 %v342, 32
    %v345 = vpop.permute.xlu0 %344
    %v347 = vadd.f32 %v337, %v345
    %v348 = vtanh.pop %v347
    %350 = vrot.lane.b32.xlu0 %v348, 32
    %v351 = vpop.permute.xlu0 %350
    %v353 = vmul.f32 %v335, %v351
    %v354 = vld [vmem:[#allocation2 + $0x4] sm:$0x3]
    %356 = vrot.lane.b32.xlu0 %v353, 64
    %v357 = vpop.permute.xlu0 %356
    %v358 = vsel %vm154, %v357, 0
    %360 = vmatprep.subr.mxu0 0.0
    %361 = vmatpush1.msra.mxu0 %v56
    %362 = vmatprep.subr.mxu0 0.0
    %363 = vmatpush1.msra.mxu0 %v57
    %364 = vmatprep.subr.mxu0 0.0
    %365 = vmatpush1.msra.mxu0 %v58
    %366 = vmatprep.subr.mxu0 0.0
    %367 = vmatpush1.msra.mxu0 %v59
    %368 = vmatprep.subr.mxu0 0.0
    %369 = vmatpush1.msra.mxu0 0.0
    %370 = vmatprep.subr.mxu0 0.0
    %371 = vmatpush1.msra.mxu0 0.0
    %372 = vmatprep.subr.mxu0 0.0
    %373 = vmatpush1.msra.mxu0 0.0
    %374 = vmatprep.subr.mxu0 0.0
    %375 = vmatpush1.msra.mxu0 0.0
    %376 = vmatprep.subr.mxu0 0.0
    %377 = vmatpush1.msra.mxu0 0.0
    %378 = vmatprep.subr.mxu0 0.0
    %379 = vmatpush1.msra.mxu0 0.0
    %380 = vmatprep.subr.mxu0 0.0
    %381 = vmatpush1.msra.mxu0 0.0
    %382 = vmatprep.subr.mxu0 0.0
    %383 = vmatpush1.msra.mxu0 0.0
    %384 = vmatprep.subr.mxu0 0.0
    %385 = vmatpush1.msra.mxu0 0.0
    %386 = vmatprep.subr.mxu0 0.0
    %387 = vmatpush1.msra.mxu0 0.0
    %388 = vmatprep.subr.mxu0 0.0
    %389 = vmatpush1.msra.mxu0 0.0
    %390 = vmatprep.subr.mxu0 0.0
    %391 = vmatpush1.msra.mxu0 0.0
    %392 = vmatprep.subr.mxu0 0.0
    %393 = vmatpush1.msra.mxu0 0.0
    %394 = vmatprep.subr.mxu0 0.0
    %395 = vmatpush1.msra.mxu0 0.0
    %396 = vmatprep.subr.mxu0 0.0
    %397 = vmatpush1.msra.mxu0 0.0
    %398 = vmatprep.subr.mxu0 0.0
    %399 = vmatpush1.msra.mxu0 0.0
    %400 = vmatprep.subr.mxu0 0.0
    %401 = vmatpush1.msra.mxu0 0.0
    %402 = vmatprep.subr.mxu0 0.0
    %403 = vmatpush1.msra.mxu0 0.0
    %404 = vmatprep.subr.mxu0 0.0
    %405 = vmatpush1.msra.mxu0 0.0
    %406 = vmatprep.subr.mxu0 0.0
    %407 = vmatpush1.msra.mxu0 0.0
    %408 = vmatprep.subr.mxu0 0.0
    %409 = vmatpush1.msra.mxu0 0.0
    %410 = vmatprep.subr.mxu0 0.0
    %411 = vmatpush1.msra.mxu0 0.0
    %412 = vmatprep.subr.mxu0 0.0
    %413 = vmatpush1.msra.mxu0 0.0
    %414 = vmatprep.subr.mxu0 0.0
    %415 = vmatpush1.msra.mxu0 0.0
    %416 = vmatprep.subr.mxu0 0.0
    %417 = vmatpush1.msra.mxu0 0.0
    %418 = vmatprep.subr.mxu0 0.0
    %419 = vmatpush1.msra.mxu0 0.0
    %420 = vmatprep.subr.mxu0 0.0
    %421 = vmatpush1.msra.mxu0 0.0
    %422 = vmatprep.subr.mxu0 0.0
    %423 = vmatpush1.msra.mxu0 0.0
    %424 = vmatprep.mubr.f32.mxu0 0.0
    %425 = vmatmul.mubr.f32.gmra.mrb[0].mxu0 %v358
    %v426 = vpop.f32.mrb[0].mxu0
    %v427 = vadd.f32 0.0, %v426
    %v428 = vpop.f32.mrb[0].mxu0
    %429 = vdwg.mxu0
    %v430 = vadd.f32 %v354, %v427
    %v431 = vxor.u32 %v430, 2147483648
    %v432 = vmul.f32 %v431, 1.442695
    %v433 = vpow.pop %v432
    %v434 = vadd.f32 %v433, 1.0
    %v435 = vrcp.pop %v434
    %v436 = vmul.f32 1.0, %v435
    %v437 = vtanh.pop %v430
    %v438 = vmul.f32 %v436, %v347
    %440 = vrot.lane.b32.xlu0 %v437, 32
    %v441 = vpop.permute.xlu0 %440
    %v443 = vmul.f32 %v436, %v441
    %445 = vrot.lane.b32.xlu0 %v443, 32
    %v446 = vpop.permute.xlu0 %445
    %v448 = vadd.f32 %v438, %v446
    %v449 = vtanh.pop %v448
    %451 = vrot.lane.b32.xlu0 %v449, 32
    %v452 = vpop.permute.xlu0 %451
    %v454 = vmul.f32 %v436, %v452
    %v455 = vld [vmem:[#allocation2 + $0x6] sm:$0x3]
    %457 = vrot.lane.b32.xlu0 %v454, 64
    %v458 = vpop.permute.xlu0 %457
    %v459 = vsel %vm154, %v458, 0
    %461 = vmatprep.subr.mxu0 0.0
    %462 = vmatpush1.msra.mxu0 %v56
    %463 = vmatprep.subr.mxu0 0.0
    %464 = vmatpush1.msra.mxu0 %v57
    %465 = vmatprep.subr.mxu0 0.0
    %466 = vmatpush1.msra.mxu0 %v58
    %467 = vmatprep.subr.mxu0 0.0
    %468 = vmatpush1.msra.mxu0 %v59
    %469 = vmatprep.subr.mxu0 0.0
    %470 = vmatpush1.msra.mxu0 0.0
    %471 = vmatprep.subr.mxu0 0.0
    %472 = vmatpush1.msra.mxu0 0.0
    %473 = vmatprep.subr.mxu0 0.0
    %474 = vmatpush1.msra.mxu0 0.0
    %475 = vmatprep.subr.mxu0 0.0
    %476 = vmatpush1.msra.mxu0 0.0
    %477 = vmatprep.subr.mxu0 0.0
    %478 = vmatpush1.msra.mxu0 0.0
    %479 = vmatprep.subr.mxu0 0.0
    %480 = vmatpush1.msra.mxu0 0.0
    %481 = vmatprep.subr.mxu0 0.0
    %482 = vmatpush1.msra.mxu0 0.0
    %483 = vmatprep.subr.mxu0 0.0
    %484 = vmatpush1.msra.mxu0 0.0
    %485 = vmatprep.subr.mxu0 0.0
    %486 = vmatpush1.msra.mxu0 0.0
    %487 = vmatprep.subr.mxu0 0.0
    %488 = vmatpush1.msra.mxu0 0.0
    %489 = vmatprep.subr.mxu0 0.0
    %490 = vmatpush1.msra.mxu0 0.0
    %491 = vmatprep.subr.mxu0 0.0
    %492 = vmatpush1.msra.mxu0 0.0
    %493 = vmatprep.subr.mxu0 0.0
    %494 = vmatpush1.msra.mxu0 0.0
    %495 = vmatprep.subr.mxu0 0.0
    %496 = vmatpush1.msra.mxu0 0.0
    %497 = vmatprep.subr.mxu0 0.0
    %498 = vmatpush1.msra.mxu0 0.0
    %499 = vmatprep.subr.mxu0 0.0
    %500 = vmatpush1.msra.mxu0 0.0
    %501 = vmatprep.subr.mxu0 0.0
    %502 = vmatpush1.msra.mxu0 0.0
    %503 = vmatprep.subr.mxu0 0.0
    %504 = vmatpush1.msra.mxu0 0.0
    %505 = vmatprep.subr.mxu0 0.0
    %506 = vmatpush1.msra.mxu0 0.0
    %507 = vmatprep.subr.mxu0 0.0
    %508 = vmatpush1.msra.mxu0 0.0
    %509 = vmatprep.subr.mxu0 0.0
    %510 = vmatpush1.msra.mxu0 0.0
    %511 = vmatprep.subr.mxu0 0.0
    %512 = vmatpush1.msra.mxu0 0.0
    %513 = vmatprep.subr.mxu0 0.0
    %514 = vmatpush1.msra.mxu0 0.0
    %515 = vmatprep.subr.mxu0 0.0
    %516 = vmatpush1.msra.mxu0 0.0
    %517 = vmatprep.subr.mxu0 0.0
    %518 = vmatpush1.msra.mxu0 0.0
    %519 = vmatprep.subr.mxu0 0.0
    %520 = vmatpush1.msra.mxu0 0.0
    %521 = vmatprep.subr.mxu0 0.0
    %522 = vmatpush1.msra.mxu0 0.0
    %523 = vmatprep.subr.mxu0 0.0
    %524 = vmatpush1.msra.mxu0 0.0
    %525 = vmatprep.mubr.f32.mxu0 0.0
    %526 = vmatmul.mubr.f32.gmra.mrb[0].mxu0 %v459
    %v527 = vpop.f32.mrb[0].mxu0
    %v528 = vadd.f32 0.0, %v527
    %v529 = vpop.f32.mrb[0].mxu0
    %530 = vdwg.mxu0
    %v531 = vadd.f32 %v455, %v528
    %v532 = vxor.u32 %v531, 2147483648
    %v533 = vmul.f32 %v532, 1.442695
    %v534 = vpow.pop %v533
    %v535 = vadd.f32 %v534, 1.0
    %v536 = vrcp.pop %v535
    %v537 = vmul.f32 1.0, %v536
    %v538 = vtanh.pop %v531
    %v539 = vmul.f32 %v537, %v448
    %541 = vrot.lane.b32.xlu0 %v538, 32
    %v542 = vpop.permute.xlu0 %541
    %v544 = vmul.f32 %v537, %v542
    %546 = vrot.lane.b32.xlu0 %v544, 32
    %v547 = vpop.permute.xlu0 %546
    %v549 = vadd.f32 %v539, %v547
    %v550 = vtanh.pop %v549
    %552 = vrot.lane.b32.xlu0 %v550, 32
    %v553 = vpop.permute.xlu0 %552
    %v555 = vmul.f32 %v537, %v553
    %v556 = vld [vmem:[#allocation2 + $0x8] sm:$0x3]
    %558 = vrot.lane.b32.xlu0 %v555, 64
    %v559 = vpop.permute.xlu0 %558
    %v560 = vsel %vm154, %v559, 0
    %562 = vmatprep.subr.mxu0 0.0
    %563 = vmatpush1.msra.mxu0 %v56
    %564 = vmatprep.subr.mxu0 0.0
    %565 = vmatpush1.msra.mxu0 %v57
    %566 = vmatprep.subr.mxu0 0.0
    %567 = vmatpush1.msra.mxu0 %v58
    %568 = vmatprep.subr.mxu0 0.0
    %569 = vmatpush1.msra.mxu0 %v59
    %570 = vmatprep.subr.mxu0 0.0
    %571 = vmatpush1.msra.mxu0 0.0
    %572 = vmatprep.subr.mxu0 0.0
    %573 = vmatpush1.msra.mxu0 0.0
    %574 = vmatprep.subr.mxu0 0.0
    %575 = vmatpush1.msra.mxu0 0.0
    %576 = vmatprep.subr.mxu0 0.0
    %577 = vmatpush1.msra.mxu0 0.0
    %578 = vmatprep.subr.mxu0 0.0
    %579 = vmatpush1.msra.mxu0 0.0
    %580 = vmatprep.subr.mxu0 0.0
    %581 = vmatpush1.msra.mxu0 0.0
    %582 = vmatprep.subr.mxu0 0.0
    %583 = vmatpush1.msra.mxu0 0.0
    %584 = vmatprep.subr.mxu0 0.0
    %585 = vmatpush1.msra.mxu0 0.0
    %586 = vmatprep.subr.mxu0 0.0
    %587 = vmatpush1.msra.mxu0 0.0
    %588 = vmatprep.subr.mxu0 0.0
    %589 = vmatpush1.msra.mxu0 0.0
    %590 = vmatprep.subr.mxu0 0.0
    %591 = vmatpush1.msra.mxu0 0.0
    %592 = vmatprep.subr.mxu0 0.0
    %593 = vmatpush1.msra.mxu0 0.0
    %594 = vmatprep.subr.mxu0 0.0
    %595 = vmatpush1.msra.mxu0 0.0
    %596 = vmatprep.subr.mxu0 0.0
    %597 = vmatpush1.msra.mxu0 0.0
    %598 = vmatprep.subr.mxu0 0.0
    %599 = vmatpush1.msra.mxu0 0.0
    %600 = vmatprep.subr.mxu0 0.0
    %601 = vmatpush1.msra.mxu0 0.0
    %602 = vmatprep.subr.mxu0 0.0
    %603 = vmatpush1.msra.mxu0 0.0
    %604 = vmatprep.subr.mxu0 0.0
    %605 = vmatpush1.msra.mxu0 0.0
    %606 = vmatprep.subr.mxu0 0.0
    %607 = vmatpush1.msra.mxu0 0.0
    %608 = vmatprep.subr.mxu0 0.0
    %609 = vmatpush1.msra.mxu0 0.0
    %610 = vmatprep.subr.mxu0 0.0
    %611 = vmatpush1.msra.mxu0 0.0
    %612 = vmatprep.subr.mxu0 0.0
    %613 = vmatpush1.msra.mxu0 0.0
    %614 = vmatprep.subr.mxu0 0.0
    %615 = vmatpush1.msra.mxu0 0.0
    %616 = vmatprep.subr.mxu0 0.0
    %617 = vmatpush1.msra.mxu0 0.0
    %618 = vmatprep.subr.mxu0 0.0
    %619 = vmatpush1.msra.mxu0 0.0
    %620 = vmatprep.subr.mxu0 0.0
    %621 = vmatpush1.msra.mxu0 0.0
    %622 = vmatprep.subr.mxu0 0.0
    %623 = vmatpush1.msra.mxu0 0.0
    %624 = vmatprep.subr.mxu0 0.0
    %625 = vmatpush1.msra.mxu0 0.0
    %626 = vmatprep.mubr.f32.mxu0 0.0
    %627 = vmatmul.mubr.f32.gmra.mrb[0].mxu0 %v560
    %v628 = vpop.f32.mrb[0].mxu0
    %v629 = vadd.f32 0.0, %v628
    %v630 = vpop.f32.mrb[0].mxu0
    %631 = vdwg.mxu0
    %v632 = vadd.f32 %v556, %v629
    %v633 = vxor.u32 %v632, 2147483648
    %v634 = vmul.f32 %v633, 1.442695
    %v635 = vpow.pop %v634
    %v636 = vadd.f32 %v635, 1.0
    %v637 = vrcp.pop %v636
    %v638 = vmul.f32 1.0, %v637
    %v639 = vtanh.pop %v632
    %v640 = vmul.f32 %v638, %v549
    %642 = vrot.lane.b32.xlu0 %v639, 32
    %v643 = vpop.permute.xlu0 %642
    %v645 = vmul.f32 %v638, %v643
    %647 = vrot.lane.b32.xlu0 %v645, 32
    %v648 = vpop.permute.xlu0 %647
    %v650 = vadd.f32 %v640, %v648
    %v651 = vtanh.pop %v650
    %653 = vrot.lane.b32.xlu0 %v651, 32
    %v654 = vpop.permute.xlu0 %653
    %v656 = vmul.f32 %v638, %v654
    %v657 = vld [vmem:[#allocation2 + $0xa] sm:$0x3]
    %659 = vrot.lane.b32.xlu0 %v656, 64
    %v660 = vpop.permute.xlu0 %659
    %v661 = vsel %vm154, %v660, 0
    %663 = vmatprep.subr.mxu0 0.0
    %664 = vmatpush1.msra.mxu0 %v56
    %665 = vmatprep.subr.mxu0 0.0
    %666 = vmatpush1.msra.mxu0 %v57
    %667 = vmatprep.subr.mxu0 0.0
    %668 = vmatpush1.msra.mxu0 %v58
    %669 = vmatprep.subr.mxu0 0.0
    %670 = vmatpush1.msra.mxu0 %v59
    %671 = vmatprep.subr.mxu0 0.0
    %672 = vmatpush1.msra.mxu0 0.0
    %673 = vmatprep.subr.mxu0 0.0
    %674 = vmatpush1.msra.mxu0 0.0
    %675 = vmatprep.subr.mxu0 0.0
    %676 = vmatpush1.msra.mxu0 0.0
    %677 = vmatprep.subr.mxu0 0.0
    %678 = vmatpush1.msra.mxu0 0.0
    %679 = vmatprep.subr.mxu0 0.0
    %680 = vmatpush1.msra.mxu0 0.0
    %681 = vmatprep.subr.mxu0 0.0
    %682 = vmatpush1.msra.mxu0 0.0
    %683 = vmatprep.subr.mxu0 0.0
    %684 = vmatpush1.msra.mxu0 0.0
    %685 = vmatprep.subr.mxu0 0.0
    %686 = vmatpush1.msra.mxu0 0.0
    %687 = vmatprep.subr.mxu0 0.0
    %688 = vmatpush1.msra.mxu0 0.0
    %689 = vmatprep.subr.mxu0 0.0
    %690 = vmatpush1.msra.mxu0 0.0
    %691 = vmatprep.subr.mxu0 0.0
    %692 = vmatpush1.msra.mxu0 0.0
    %693 = vmatprep.subr.mxu0 0.0
    %694 = vmatpush1.msra.mxu0 0.0
    %695 = vmatprep.subr.mxu0 0.0
    %696 = vmatpush1.msra.mxu0 0.0
    %697 = vmatprep.subr.mxu0 0.0
    %698 = vmatpush1.msra.mxu0 0.0
    %699 = vmatprep.subr.mxu0 0.0
    %700 = vmatpush1.msra.mxu0 0.0
    %701 = vmatprep.subr.mxu0 0.0
    %702 = vmatpush1.msra.mxu0 0.0
    %703 = vmatprep.subr.mxu0 0.0
    %704 = vmatpush1.msra.mxu0 0.0
    %705 = vmatprep.subr.mxu0 0.0
    %706 = vmatpush1.msra.mxu0 0.0
    %707 = vmatprep.subr.mxu0 0.0
    %708 = vmatpush1.msra.mxu0 0.0
    %709 = vmatprep.subr.mxu0 0.0
    %710 = vmatpush1.msra.mxu0 0.0
    %711 = vmatprep.subr.mxu0 0.0
    %712 = vmatpush1.msra.mxu0 0.0
    %713 = vmatprep.subr.mxu0 0.0
    %714 = vmatpush1.msra.mxu0 0.0
    %715 = vmatprep.subr.mxu0 0.0
    %716 = vmatpush1.msra.mxu0 0.0
    %717 = vmatprep.subr.mxu0 0.0
    %718 = vmatpush1.msra.mxu0 0.0
    %719 = vmatprep.subr.mxu0 0.0
    %720 = vmatpush1.msra.mxu0 0.0
    %721 = vmatprep.subr.mxu0 0.0
    %722 = vmatpush1.msra.mxu0 0.0
    %723 = vmatprep.subr.mxu0 0.0
    %724 = vmatpush1.msra.mxu0 0.0
    %725 = vmatprep.subr.mxu0 0.0
    %726 = vmatpush1.msra.mxu0 0.0
    %727 = vmatprep.mubr.f32.mxu0 0.0
    %728 = vmatmul.mubr.f32.gmra.mrb[0].mxu0 %v661
    %v729 = vpop.f32.mrb[0].mxu0
    %v730 = vadd.f32 0.0, %v729
    %v731 = vpop.f32.mrb[0].mxu0
    %732 = vdwg.mxu0
    %v733 = vadd.f32 %v657, %v730
    %v734 = vxor.u32 %v733, 2147483648
    %v735 = vmul.f32 %v734, 1.442695
    %v736 = vpow.pop %v735
    %v737 = vadd.f32 %v736, 1.0
    %v738 = vrcp.pop %v737
    %v739 = vmul.f32 1.0, %v738
    %v740 = vtanh.pop %v733
    %v741 = vmul.f32 %v739, %v650
    %743 = vrot.lane.b32.xlu0 %v740, 32
    %v744 = vpop.permute.xlu0 %743
    %v746 = vmul.f32 %v739, %v744
    %748 = vrot.lane.b32.xlu0 %v746, 32
    %v749 = vpop.permute.xlu0 %748
    %v751 = vadd.f32 %v741, %v749
    %v752 = vtanh.pop %v751
    %754 = vrot.lane.b32.xlu0 %v752, 32
    %v755 = vpop.permute.xlu0 %754
    %v757 = vmul.f32 %v739, %v755
    %v758 = vld [vmem:[#allocation2 + $0xc] sm:$0x3]
    %760 = vrot.lane.b32.xlu0 %v757, 64
    %v761 = vpop.permute.xlu0 %760
    %v762 = vsel %vm154, %v761, 0
    %764 = vmatprep.subr.mxu0 0.0
    %765 = vmatpush1.msra.mxu0 %v56
    %766 = vmatprep.subr.mxu0 0.0
    %767 = vmatpush1.msra.mxu0 %v57
    %768 = vmatprep.subr.mxu0 0.0
    %769 = vmatpush1.msra.mxu0 %v58
    %770 = vmatprep.subr.mxu0 0.0
    %771 = vmatpush1.msra.mxu0 %v59
    %772 = vmatprep.subr.mxu0 0.0
    %773 = vmatpush1.msra.mxu0 0.0
    %774 = vmatprep.subr.mxu0 0.0
    %775 = vmatpush1.msra.mxu0 0.0
    %776 = vmatprep.subr.mxu0 0.0
    %777 = vmatpush1.msra.mxu0 0.0
    %778 = vmatprep.subr.mxu0 0.0
    %779 = vmatpush1.msra.mxu0 0.0
    %780 = vmatprep.subr.mxu0 0.0
    %781 = vmatpush1.msra.mxu0 0.0
    %782 = vmatprep.subr.mxu0 0.0
    %783 = vmatpush1.msra.mxu0 0.0
    %784 = vmatprep.subr.mxu0 0.0
    %785 = vmatpush1.msra.mxu0 0.0
    %786 = vmatprep.subr.mxu0 0.0
    %787 = vmatpush1.msra.mxu0 0.0
    %788 = vmatprep.subr.mxu0 0.0
    %789 = vmatpush1.msra.mxu0 0.0
    %790 = vmatprep.subr.mxu0 0.0
    %791 = vmatpush1.msra.mxu0 0.0
    %792 = vmatprep.subr.mxu0 0.0
    %793 = vmatpush1.msra.mxu0 0.0
    %794 = vmatprep.subr.mxu0 0.0
    %795 = vmatpush1.msra.mxu0 0.0
    %796 = vmatprep.subr.mxu0 0.0
    %797 = vmatpush1.msra.mxu0 0.0
    %798 = vmatprep.subr.mxu0 0.0
    %799 = vmatpush1.msra.mxu0 0.0
    %800 = vmatprep.subr.mxu0 0.0
    %801 = vmatpush1.msra.mxu0 0.0
    %802 = vmatprep.subr.mxu0 0.0
    %803 = vmatpush1.msra.mxu0 0.0
    %804 = vmatprep.subr.mxu0 0.0
    %805 = vmatpush1.msra.mxu0 0.0
    %806 = vmatprep.subr.mxu0 0.0
    %807 = vmatpush1.msra.mxu0 0.0
    %808 = vmatprep.subr.mxu0 0.0
    %809 = vmatpush1.msra.mxu0 0.0
    %810 = vmatprep.subr.mxu0 0.0
    %811 = vmatpush1.msra.mxu0 0.0
    %812 = vmatprep.subr.mxu0 0.0
    %813 = vmatpush1.msra.mxu0 0.0
    %814 = vmatprep.subr.mxu0 0.0
    %815 = vmatpush1.msra.mxu0 0.0
    %816 = vmatprep.subr.mxu0 0.0
    %817 = vmatpush1.msra.mxu0 0.0
    %818 = vmatprep.subr.mxu0 0.0
    %819 = vmatpush1.msra.mxu0 0.0
    %820 = vmatprep.subr.mxu0 0.0
    %821 = vmatpush1.msra.mxu0 0.0
    %822 = vmatprep.subr.mxu0 0.0
    %823 = vmatpush1.msra.mxu0 0.0
    %824 = vmatprep.subr.mxu0 0.0
    %825 = vmatpush1.msra.mxu0 0.0
    %826 = vmatprep.subr.mxu0 0.0
    %827 = vmatpush1.msra.mxu0 0.0
    %828 = vmatprep.mubr.f32.mxu0 0.0
    %829 = vmatmul.mubr.f32.gmra.mrb[0].mxu0 %v762
    %v830 = vpop.f32.mrb[0].mxu0
    %v831 = vadd.f32 0.0, %v830
    %v832 = vpop.f32.mrb[0].mxu0
    %833 = vdwg.mxu0
    %v834 = vadd.f32 %v758, %v831
    %v835 = vxor.u32 %v834, 2147483648
    %v836 = vmul.f32 %v835, 1.442695
    %v837 = vpow.pop %v836
    %v838 = vadd.f32 %v837, 1.0
    %v839 = vrcp.pop %v838
    %v840 = vmul.f32 1.0, %v839
    %v841 = vtanh.pop %v834
    %v842 = vmul.f32 %v840, %v751
    %844 = vrot.lane.b32.xlu0 %v841, 32
    %v845 = vpop.permute.xlu0 %844
    %v847 = vmul.f32 %v840, %v845
    %849 = vrot.lane.b32.xlu0 %v847, 32
    %v850 = vpop.permute.xlu0 %849
    %v852 = vadd.f32 %v842, %v850
    %v853 = vtanh.pop %v852
    %855 = vrot.lane.b32.xlu0 %v853, 32
    %v856 = vpop.permute.xlu0 %855
    %v858 = vmul.f32 %v840, %v856
    %v859 = vld [vmem:[#allocation2 + $0xe] sm:$0x3]
    %861 = vrot.lane.b32.xlu0 %v858, 64
    %v862 = vpop.permute.xlu0 %861
    %v863 = vsel %vm154, %v862, 0
    %865 = vmatprep.subr.mxu0 0.0
    %866 = vmatpush1.msra.mxu0 %v56
    %867 = vmatprep.subr.mxu0 0.0
    %868 = vmatpush1.msra.mxu0 %v57
    %869 = vmatprep.subr.mxu0 0.0
    %870 = vmatpush1.msra.mxu0 %v58
    %871 = vmatprep.subr.mxu0 0.0
    %872 = vmatpush1.msra.mxu0 %v59
    %873 = vmatprep.subr.mxu0 0.0
    %874 = vmatpush1.msra.mxu0 0.0
    %875 = vmatprep.subr.mxu0 0.0
    %876 = vmatpush1.msra.mxu0 0.0
    %877 = vmatprep.subr.mxu0 0.0
    %878 = vmatpush1.msra.mxu0 0.0
    %879 = vmatprep.subr.mxu0 0.0
    %880 = vmatpush1.msra.mxu0 0.0
    %881 = vmatprep.subr.mxu0 0.0
    %882 = vmatpush1.msra.mxu0 0.0
    %883 = vmatprep.subr.mxu0 0.0
    %884 = vmatpush1.msra.mxu0 0.0
    %885 = vmatprep.subr.mxu0 0.0
    %886 = vmatpush1.msra.mxu0 0.0
    %887 = vmatprep.subr.mxu0 0.0
    %888 = vmatpush1.msra.mxu0 0.0
    %889 = vmatprep.subr.mxu0 0.0
    %890 = vmatpush1.msra.mxu0 0.0
    %891 = vmatprep.subr.mxu0 0.0
    %892 = vmatpush1.msra.mxu0 0.0
    %893 = vmatprep.subr.mxu0 0.0
    %894 = vmatpush1.msra.mxu0 0.0
    %895 = vmatprep.subr.mxu0 0.0
    %896 = vmatpush1.msra.mxu0 0.0
    %897 = vmatprep.subr.mxu0 0.0
    %898 = vmatpush1.msra.mxu0 0.0
    %899 = vmatprep.subr.mxu0 0.0
    %900 = vmatpush1.msra.mxu0 0.0
    %901 = vmatprep.subr.mxu0 0.0
    %902 = vmatpush1.msra.mxu0 0.0
    %903 = vmatprep.subr.mxu0 0.0
    %904 = vmatpush1.msra.mxu0 0.0
    %905 = vmatprep.subr.mxu0 0.0
    %906 = vmatpush1.msra.mxu0 0.0
    %907 = vmatprep.subr.mxu0 0.0
    %908 = vmatpush1.msra.mxu0 0.0
    %909 = vmatprep.subr.mxu0 0.0
    %910 = vmatpush1.msra.mxu0 0.0
    %911 = vmatprep.subr.mxu0 0.0
    %912 = vmatpush1.msra.mxu0 0.0
    %913 = vmatprep.subr.mxu0 0.0
    %914 = vmatpush1.msra.mxu0 0.0
    %915 = vmatprep.subr.mxu0 0.0
    %916 = vmatpush1.msra.mxu0 0.0
    %917 = vmatprep.subr.mxu0 0.0
    %918 = vmatpush1.msra.mxu0 0.0
    %919 = vmatprep.subr.mxu0 0.0
    %920 = vmatpush1.msra.mxu0 0.0
    %921 = vmatprep.subr.mxu0 0.0
    %922 = vmatpush1.msra.mxu0 0.0
    %923 = vmatprep.subr.mxu0 0.0
    %924 = vmatpush1.msra.mxu0 0.0
    %925 = vmatprep.subr.mxu0 0.0
    %926 = vmatpush1.msra.mxu0 0.0
    %927 = vmatprep.subr.mxu0 0.0
    %928 = vmatpush1.msra.mxu0 0.0
    %929 = vmatprep.mubr.f32.mxu0 0.0
    %930 = vmatmul.mubr.f32.gmra.mrb[0].mxu0 %v863
    %v931 = vpop.f32.mrb[0].mxu0
    %v932 = vadd.f32 0.0, %v931
    %v933 = vpop.f32.mrb[0].mxu0
    %934 = vdwg.mxu0
    %v935 = vadd.f32 %v859, %v932
    %v936 = vxor.u32 %v935, 2147483648
    %v937 = vmul.f32 %v936, 1.442695
    %v938 = vpow.pop %v937
    %v939 = vadd.f32 %v938, 1.0
    %v940 = vrcp.pop %v939
    %v941 = vmul.f32 1.0, %v940
    %v942 = vtanh.pop %v935
    %v943 = vmul.f32 %v941, %v852
    %945 = vrot.lane.b32.xlu0 %v942, 32
    %v946 = vpop.permute.xlu0 %945
    %v948 = vmul.f32 %v941, %v946
    %950 = vrot.lane.b32.xlu0 %v948, 32
    %v951 = vpop.permute.xlu0 %950
    %v953 = vadd.f32 %v943, %v951
    %v954 = vtanh.pop %v953
    %956 = vrot.lane.b32.xlu0 %v954, 32
    %v957 = vpop.permute.xlu0 %956
    %v959 = vmul.f32 %v941, %v957
    %v960 = vmax.f32 %v959, 0.0
    %v961 = vld [vmem:[#allocation8 + $0x18] sm:$0xff]
    %v962 = vld [vmem:[#allocation8 + $0x20] sm:$0xff]
    %v963 = vld [vmem:[#allocation8 + $0x28] sm:$0xff]
    %v964 = vld [vmem:[#allocation8 + $0x30] sm:$0xff]
    %v965 = vld [vmem:[#allocation8 + $0x38] sm:$0x1]
    %v966 = vlaneseq
    %v967 = vshrl.u32 %v966, 7
    %v968 = vsub.s32 0, %v967
    %v969 = vrot.slane %v965, %v968
    %971 = vrot.lane.b32.xlu0 %v960, 64
    %v972 = vpop.permute.xlu0 %971
    %v973 = vsel %vm154, %v972, 0
    %975 = vmatprep.subr.mxu0 0.0
    %976 = vmatpush1.msra.mxu0 %v961
    %977 = vmatprep.subr.mxu0 0.0
    %978 = vmatpush1.msra.mxu0 %v962
    %979 = vmatprep.subr.mxu0 0.0
    %980 = vmatpush1.msra.mxu0 %v963
    %981 = vmatprep.subr.mxu0 0.0
    %982 = vmatpush1.msra.mxu0 %v964
    %983 = vmatprep.subr.mxu0 0.0
    %984 = vmatpush1.msra.mxu0 0.0
    %985 = vmatprep.subr.mxu0 0.0
    %986 = vmatpush1.msra.mxu0 0.0
    %987 = vmatprep.subr.mxu0 0.0
    %988 = vmatpush1.msra.mxu0 0.0
    %989 = vmatprep.subr.mxu0 0.0
    %990 = vmatpush1.msra.mxu0 0.0
    %991 = vmatprep.subr.mxu0 0.0
    %992 = vmatpush1.msra.mxu0 0.0
    %993 = vmatprep.subr.mxu0 0.0
    %994 = vmatpush1.msra.mxu0 0.0
    %995 = vmatprep.subr.mxu0 0.0
    %996 = vmatpush1.msra.mxu0 0.0
    %997 = vmatprep.subr.mxu0 0.0
    %998 = vmatpush1.msra.mxu0 0.0
    %999 = vmatprep.subr.mxu0 0.0
    %1000 = vmatpush1.msra.mxu0 0.0
    %1001 = vmatprep.subr.mxu0 0.0
    %1002 = vmatpush1.msra.mxu0 0.0
    %1003 = vmatprep.subr.mxu0 0.0
    %1004 = vmatpush1.msra.mxu0 0.0
    %1005 = vmatprep.subr.mxu0 0.0
    %1006 = vmatpush1.msra.mxu0 0.0
    %1007 = vmatprep.subr.mxu0 0.0
    %1008 = vmatpush1.msra.mxu0 0.0
    %1009 = vmatprep.subr.mxu0 0.0
    %1010 = vmatpush1.msra.mxu0 0.0
    %1011 = vmatprep.subr.mxu0 0.0
    %1012 = vmatpush1.msra.mxu0 0.0
    %1013 = vmatprep.subr.mxu0 0.0
    %1014 = vmatpush1.msra.mxu0 0.0
    %1015 = vmatprep.subr.mxu0 0.0
    %1016 = vmatpush1.msra.mxu0 0.0
    %1017 = vmatprep.subr.mxu0 0.0
    %1018 = vmatpush1.msra.mxu0 0.0
    %1019 = vmatprep.subr.mxu0 0.0
    %1020 = vmatpush1.msra.mxu0 0.0
    %1021 = vmatprep.subr.mxu0 0.0
    %1022 = vmatpush1.msra.mxu0 0.0
    %1023 = vmatprep.subr.mxu0 0.0
    %1024 = vmatpush1.msra.mxu0 0.0
    %1025 = vmatprep.subr.mxu0 0.0
    %1026 = vmatpush1.msra.mxu0 0.0
    %1027 = vmatprep.subr.mxu0 0.0
    %1028 = vmatpush1.msra.mxu0 0.0
    %1029 = vmatprep.subr.mxu0 0.0
    %1030 = vmatpush1.msra.mxu0 0.0
    %1031 = vmatprep.subr.mxu0 0.0
    %1032 = vmatpush1.msra.mxu0 0.0
    %1033 = vmatprep.subr.mxu0 0.0
    %1034 = vmatpush1.msra.mxu0 0.0
    %1035 = vmatprep.subr.mxu0 0.0
    %1036 = vmatpush1.msra.mxu0 0.0
    %1037 = vmatprep.subr.mxu0 0.0
    %1038 = vmatpush1.msra.mxu0 0.0
    %1039 = vmatprep.mubr.f32.mxu0 0.0
    %1040 = vmatmul.mubr.f32.gmra.mrb[0].mxu0 %v973
    %v1041 = vpop.f32.mrb[0].mxu0
    %v1042 = vadd.f32 %v969, %v1041
    %v1043 = vpop.f32.mrb[0].mxu0
    %1044 = vdwg.mxu0
    %1045 = vst [vmem:[#allocation9] sm:$0x3] %v1042
    // Predicated region
    $region26: #{tpu_custom_call.1} parent=1 // pred_check
      _
    $region27: #{tpu_custom_call.1} parent=1 // pred_check_branch
      %1047 = sbr.rel (0) target = $region29
    $region28: #{tpu_custom_call.1} parent=1 // pred_region
      %s1049 = ssub.s32 32, 32
      %1050 = vsyncadd [#allocation5], %s1049
      %s1052 = sshll.u32 [#allocation9], 4
      %s1053 = int_to_ptr.vmem [resolvable:$true] %s1052
      %1055 = dma.vmem_to_hbm [thread:$0]  %s1053, 32, %s3, [#allocation5]
    $region29: #{tpu_custom_call.1} parent=1 // pred_fallthru
      _
    // Predicated region
    $region30: #{tpu_custom_call.1} parent=1 // pred_check
      _
    $region31: #{tpu_custom_call.1} parent=1 // pred_check_branch
      %1057 = sbr.rel (0) target = $region33
    $region32: #{tpu_custom_call.1} parent=1 // pred_region
      %1058 = dma.done [#allocation5], 32
    $region33: #{tpu_custom_call.1} parent=1 // pred_fallthru
      _
    %1059 = vsyncpa [#allocation4], 1
    %1060 = vsyncpa [#allocation7], 1
    %1061 = vsyncpa [#allocation5], 1

</llo_original>
